<compile_context>
chip_gen: v5e
topology: v5e:2x2
jax: 0.10.0
libtpu: 0.0.40
codegen_flags: <defaults>
</compile_context>

<pallas_src>
import functools

import jax
import jax.numpy as jnp
from jax import lax
from jax.experimental import pallas as pl
from jax.experimental.pallas import tpu as pltpu


def _map_loss_kernel(pred_ref, tgt_ref, out_ref, rowmax_ref, *,
                     normalize: bool, approx_recip: bool,
                     tiles_per_core: int, tile_d: int, d_total: int,
                     needs_mask: bool):
    c = pl.program_id(0)   # D-half index (parallel across cores on v7x)
    j = pl.program_id(1)   # D tile within this half ("arbitrary")

    pred = pred_ref[...].astype(jnp.float32)   # (T, TD)
    tgt = tgt_ref[...].astype(jnp.float32)     # (T, TD)

    if normalize:
        # Per-column max over dim 0: exact because T is never tiled.
        maxes = jnp.max(pred, axis=0, keepdims=True)                  # (1, TD)
        inv = pl.reciprocal(maxes + jnp.float32(1e-6), approx=approx_recip)
        prod = pred * tgt * inv        # fold the divide into two vmuls
    else:
        prod = pred * tgt

    if needs_mask:
        # Ragged tail / fully-OOB tiles: lanes whose global column >= D get
        # -inf so padding garbage can never win a max.
        col0 = (c * tiles_per_core + j) * tile_d
        lane = lax.broadcasted_iota(jnp.int32, (1, tile_d), 1)
        prod = jnp.where(col0 + lane < d_total, prod, -jnp.inf)

    # Lane-wide running row max: fold TD -> 128 with elementwise maxima (VPU);
    # the cross-lane reduce is deferred to the tiny final combine outside.
    tile_max = prod[:, 0:128]
    for k in range(1, tile_d // 128):
        tile_max = jnp.maximum(tile_max, prod[:, k * 128:(k + 1) * 128])

    @pl.when(j == 0)
    def _():
        rowmax_ref[...] = tile_max

    @pl.when(j > 0)
    def _():
        rowmax_ref[...] = jnp.maximum(rowmax_ref[...], tile_max)

    @pl.when(j == tiles_per_core - 1)
    def _():
        out_ref[...] = rowmax_ref[...]


def _vmem_capacity_bytes() -> int:
    try:
        return int(pltpu.get_tpu_info().vmem_capacity_bytes)
    except Exception:
        return 64 << 20   # conservative default (v7x physical VMEM per core)


def _choose_tile_d(t: int, d: int, itemsize_sum: int, vmem_capacity: int,
                   max_tile_d=None) -> int:
    """Largest lane-aligned TD whose double-buffered working set fits VMEM."""
    d_pad = -(-d // 128) * 128
    # Per-column bytes: 2 inputs x 2 pipeline buffers + ~2 f32-sized temporaries.
    bytes_per_col = t * (2 * itemsize_sum + 2 * 4)
    budget = max(vmem_capacity - (8 << 20), 4 << 20)
    td = (budget // bytes_per_col) // 128 * 128
    td = max(128, min(int(td), d_pad))
    if max_tile_d is not None:
        td = max(128, min(td, (max_tile_d // 128) * 128))
    return td


def map_loss_l1_pos(onset_map_pred, onset_map, *, normalize: bool = True,
                    approx_recip: bool = False, max_tile_d=None):
    """Pallas implementation of MapLossL1Pos.forward. Returns a scalar loss."""
    assert onset_map_pred.shape == onset_map.shape
    assert onset_map_pred.ndim == 2
    t, d = onset_map_pred.shape

    itemsize_sum = (jnp.dtype(onset_map_pred.dtype).itemsize
                    + jnp.dtype(onset_map.dtype).itemsize)
    cap = _vmem_capacity_bytes()
    td = _choose_tile_d(t, d, itemsize_sum, cap, max_tile_d)

    n_d = -(-d // td)                      # total D tiles
    n_split = 2 if n_d >= 2 else 1         # feed both v7x TensorCores
    tiles_per_core = -(-n_d // n_split)
    needs_mask = (d % td) != 0

    # Scoped VMEM limit sized to the double-buffered inputs + f32 temporaries.
    per_col = t * (2 * itemsize_sum + 2 * 4)
    vmem_limit = int(min(cap, max(per_col * td + (4 << 20), 16 << 20)))

    kernel = functools.partial(
        _map_loss_kernel, normalize=normalize, approx_recip=approx_recip,
        tiles_per_core=tiles_per_core, tile_d=td, d_total=d,
        needs_mask=needs_mask)

    def in_map(c, j):
        # Clamp so a fully-out-of-range tile (odd tile count split over 2
        # cores) re-reads the last valid tile; duplicates are harmless for max.
        return (0, jnp.minimum(c * tiles_per_core + j, n_d - 1))

    partials = pl.pallas_call(
        kernel,
        out_shape=jax.ShapeDtypeStruct((n_split, t, 128), jnp.float32),
        grid=(n_split, tiles_per_core),
        in_specs=[
            pl.BlockSpec((t, td), in_map),
            pl.BlockSpec((t, td), in_map),
        ],
        out_specs=pl.BlockSpec((None, t, 128), lambda c, j: (c, 0, 0)),
        scratch_shapes=[pltpu.VMEM((t, 128), jnp.float32)],
        compiler_params=pltpu.CompilerParams(
            dimension_semantics=("parallel", "arbitrary"),
            vmem_limit_bytes=vmem_limit),
    )(onset_map_pred, onset_map)

    # Tiny final combine in plain JAX: max over cores + scratch lanes, then mean.
    pos_loc_max = jnp.max(partials, axis=(0, 2))          # (T,)
    return jnp.mean(jnp.float32(1.0) - pos_loc_max)


def _reference(onset_map_pred, onset_map, normalize=True):
    pred = onset_map_pred.astype(jnp.float32)
    tgt = onset_map.astype(jnp.float32)
    if normalize:
        maxes = jnp.max(pred, axis=0)
        pred = pred / (maxes + 1e-6)
    pos_loc_max = jnp.max(pred * tgt, axis=1)
    return jnp.mean(1.0 - pos_loc_max)


if __name__ == "__main__":
    key = jax.random.PRNGKey(0)
    keys = jax.random.split(key, 10)

    # Case 1: tiny map, single tile, single split.
    pred1 = jax.random.uniform(keys[0], (16, 128), dtype=jnp.float32)
    tgt1 = (jax.random.uniform(keys[1], (16, 128)) > 0.9).astype(jnp.float32)

    # Case 2: wider map, natural (budget-driven) tile -> one lane-dense tile.
    pred2 = jax.random.uniform(keys[2], (24, 1536), dtype=jnp.float32)
    tgt2 = (jax.random.uniform(keys[3], (24, 1536)) > 0.95).astype(jnp.float32)

    # Case 3: forced TD=256 -> ragged tail + odd tile count (clamped OOB tile),
    # 2-way core split, multi-step accumulator.
    pred3 = jax.random.uniform(keys[4], (16, 640), dtype=jnp.float32)
    tgt3 = (jax.random.uniform(keys[5], (16, 640)) > 0.9).astype(jnp.float32)

    # Case 4: forced TD=128 -> longer grid with ragged tail.
    pred4 = jax.random.uniform(keys[6], (32, 1000), dtype=jnp.float32)
    tgt4 = (jax.random.uniform(keys[7], (32, 1000)) > 0.95).astype(jnp.float32)

    # Case 5: narrow-dtype streaming (bf16 pred, int8 0/1 target).
    pred5 = jax.random.uniform(keys[8], (16, 400),
                               dtype=jnp.float32).astype(jnp.bfloat16)
    tgt5 = (jax.random.uniform(keys[9], (16, 400)) > 0.9).astype(jnp.int8)

    cases = [
        (pred1, tgt1, None, 1e-5),
        (pred2, tgt2, None, 1e-5),
        (pred3, tgt3, 256, 1e-5),
        (pred4, tgt4, 128, 1e-5),
        (pred5, tgt5, 128, 1e-4),
    ]

    for idx, (pred, tgt, mtd, tol) in enumerate(cases):
        ref = jax.block_until_ready(_reference(pred, tgt, normalize=True))
        out = jax.block_until_ready(
            map_loss_l1_pos(pred, tgt, normalize=True, approx_recip=False,
                            max_tile_d=mtd))
        assert jnp.allclose(out, ref, atol=tol, rtol=tol), (idx, out, ref)

    # normalize=False path on a trivial and a tiled case.
    for pred, tgt, mtd in ((pred1, tgt1, None), (pred3, tgt3, 256)):
        ref = jax.block_until_ready(_reference(pred, tgt, normalize=False))
        out = jax.block_until_ready(
            map_loss_l1_pos(pred, tgt, normalize=False, max_tile_d=mtd))
        assert jnp.allclose(out, ref, atol=1e-5, rtol=1e-5), (out, ref)

    # Optional fast path: EUP approximate reciprocal (looser tolerance).
    ref = jax.block_until_ready(_reference(pred3, tgt3, normalize=True))
    fast = jax.block_until_ready(
        map_loss_l1_pos(pred3, tgt3, normalize=True, approx_recip=True,
                        max_tile_d=256))
    assert jnp.allclose(fast, ref, atol=5e-3, rtol=5e-3), (fast, ref)

    print("KERNEL_OK")
</pallas_src>

<mosaic_0001>
module attributes {stable_mosaic.version = 11 : i64} {
  func.func @_map_loss_kernel(%arg0: i32, %arg1: i32, %arg2: memref<16x128xf32, #tpu.memory_space<vmem>>, %arg3: memref<16x128xf32, #tpu.memory_space<vmem>>, %arg4: memref<1x16x128xf32, #tpu.memory_space<vmem>>, %arg5: memref<16x128xf32, #tpu.memory_space<vmem>>) attributes {dimension_semantics = [#tpu.dimension_semantics<parallel>, #tpu.dimension_semantics<arbitrary>], iteration_bounds = array<i64: 1, 1>, scalar_prefetch = 0 : i64, scratch_operands = 1 : i64, tpu.core_type = #tpu.core_type<tc>, window_params = [{transform_indices = @transform_0, window_bounds = array<i64: 16, 128>}, {transform_indices = @transform_1, window_bounds = array<i64: 16, 128>}, {transform_indices = @transform_2, window_bounds = array<i64: 1, 16, 128>}]} {
    %c0 = arith.constant 0 : index
    %c0_0 = arith.constant 0 : index
    %0 = vector.load %arg2[%c0, %c0_0] : memref<16x128xf32, #tpu.memory_space<vmem>>, vector<16x128xf32>
    %c0_1 = arith.constant 0 : index
    %c0_2 = arith.constant 0 : index
    %1 = vector.load %arg3[%c0_1, %c0_2] : memref<16x128xf32, #tpu.memory_space<vmem>>, vector<16x128xf32>
    %cst = arith.constant dense<0xFF800000> : vector<128xf32>
    %2 = vector.multi_reduction <maximumf>, %0, %cst [0] : vector<16x128xf32> to vector<128xf32>
    %3 = vector.shape_cast %2 : vector<128xf32> to vector<1x128xf32>
    %cst_3 = arith.constant 9.99999997E-7 : f32
    %4 = vector.broadcast %cst_3 : f32 to vector<1x128xf32>
    %5 = arith.addf %3, %4 : vector<1x128xf32>
    %6 = tpu.reciprocal %5 : vector<1x128xf32> -> vector<1x128xf32>
    %7 = arith.mulf %0, %1 : vector<16x128xf32>
    %8 = vector.broadcast %6 : vector<1x128xf32> to vector<16x128xf32>
    %9 = arith.mulf %7, %8 : vector<16x128xf32>
    %c0_i32 = arith.constant 0 : i32
    %10 = arith.cmpi eq, %arg1, %c0_i32 : i32
    %11 = arith.extui %10 : i1 to i32
    %c0_i32_4 = arith.constant 0 : i32
    %12 = arith.cmpi ne, %11, %c0_i32_4 : i32
    scf.if %12 {
      %c0_9 = arith.constant 0 : index
      %c0_10 = arith.constant 0 : index
      %19 = vector.load %arg5[%c0_9, %c0_10] : memref<16x128xf32, #tpu.memory_space<vmem>>, vector<16x128xf32>
      tpu.vector_store %arg5[%c0_9, %c0_10], %9 {strides = array<i32>} : memref<16x128xf32, #tpu.memory_space<vmem>>, vector<16x128xf32>,
    } else {
    }
    %c0_i32_5 = arith.constant 0 : i32
    %13 = arith.cmpi sgt, %arg1, %c0_i32_5 : i32
    %14 = arith.extui %13 : i1 to i32
    %c0_i32_6 = arith.constant 0 : i32
    %15 = arith.cmpi ne, %14, %c0_i32_6 : i32
    scf.if %15 {
      %c0_9 = arith.constant 0 : index
      %c0_10 = arith.constant 0 : index
      %19 = vector.load %arg5[%c0_9, %c0_10] : memref<16x128xf32, #tpu.memory_space<vmem>>, vector<16x128xf32>
      %20 = arith.maximumf %19, %9 : vector<16x128xf32>
      %c0_11 = arith.constant 0 : index
      %c0_12 = arith.constant 0 : index
      %21 = vector.load %arg5[%c0_11, %c0_12] : memref<16x128xf32, #tpu.memory_space<vmem>>, vector<16x128xf32>
      tpu.vector_store %arg5[%c0_11, %c0_12], %20 {strides = array<i32>} : memref<16x128xf32, #tpu.memory_space<vmem>>, vector<16x128xf32>,
    } else {
    }
    %c0_i32_7 = arith.constant 0 : i32
    %16 = arith.cmpi eq, %arg1, %c0_i32_7 : i32
    %17 = arith.extui %16 : i1 to i32
    %c0_i32_8 = arith.constant 0 : i32
    %18 = arith.cmpi ne, %17, %c0_i32_8 : i32
    scf.if %18 {
      %c0_9 = arith.constant 0 : index
      %c0_10 = arith.constant 0 : index
      %19 = vector.load %arg5[%c0_9, %c0_10] : memref<16x128xf32, #tpu.memory_space<vmem>>, vector<16x128xf32>
      %c0_11 = arith.constant 0 : index
      %c0_12 = arith.constant 0 : index
      %c0_13 = arith.constant 0 : index
      %20 = vector.load %arg4[%c0_11, %c0_12, %c0_13] : memref<1x16x128xf32, #tpu.memory_space<vmem>>, vector<1x16x128xf32>
      %21 = vector.shape_cast %20 : vector<1x16x128xf32> to vector<16x128xf32>
      %22 = vector.shape_cast %19 : vector<16x128xf32> to vector<1x16x128xf32>
      tpu.vector_store %arg4[%c0_11, %c0_12, %c0_13], %22 {strides = array<i32>} : memref<1x16x128xf32, #tpu.memory_space<vmem>>, vector<1x16x128xf32>,
    } else {
    }
    return
  }
  func.func @transform_0(%arg0: i32, %arg1: i32) -> (i32, i32) {
    %c1_i32 = arith.constant 1 : i32
    %0 = arith.muli %arg0, %c1_i32 : i32
    %1 = arith.addi %0, %arg1 : i32
    %c0_i32 = arith.constant 0 : i32
    %2 = arith.minsi %1, %c0_i32 : i32
    %c0_i32_0 = arith.constant 0 : i32
    %c0_i32_1 = arith.constant 0 : i32
    return %c0_i32_0, %2 : i32, i32
  }
  func.func @transform_1(%arg0: i32, %arg1: i32) -> (i32, i32) {
    %c1_i32 = arith.constant 1 : i32
    %0 = arith.muli %arg0, %c1_i32 : i32
    %1 = arith.addi %0, %arg1 : i32
    %c0_i32 = arith.constant 0 : i32
    %2 = arith.minsi %1, %c0_i32 : i32
    %c0_i32_0 = arith.constant 0 : i32
    %c0_i32_1 = arith.constant 0 : i32
    return %c0_i32_0, %2 : i32, i32
  }
  func.func @transform_2(%arg0: i32, %arg1: i32) -> (i32, i32, i32) {
    %c0_i32 = arith.constant 0 : i32
    %c0_i32_0 = arith.constant 0 : i32
    %c0_i32_1 = arith.constant 0 : i32
    return %arg0, %c0_i32, %c0_i32_0 : i32, i32, i32
  }
}

</mosaic_0001>

<llo_original>
// kernel: tpu_custom_call.1
$region0: #{tpu_custom_call.1}
  #allocation0 [shape = 'u32[]', space=smem, size = 0x4, offset = 0x4, fixed_abs, tag = 'smem constant byte address 0x4 - core index']
  #allocation1 [shape = 'u32[72,128]{1,0:T(1,128)}', space=vmem, size = 0x9000, scoped, tag = 'internal scratch']
  #allocation2 [shape = 'f32[16,128]{1,0:T(8,128)}', space=vmem, size = 0x2000, scoped, tag = 'scratch operand']
  %s0 = inlined_call_operand.hbm [shape: f32[16,128], index: 0, kind: input, shape index: {}]
  %s1 = inlined_call_operand.hbm [shape: f32[16,128], index: 1, kind: input, shape index: {}]
  %s2 = inlined_call_operand.hbm [shape: f32[1,16,128], index: 2, kind: output, shape index: {}]
  %s3 = sld [smem:[#allocation0]]
  $region38: #{tpu_custom_call.1} parent=0
    _
  %s5 = ssub.s32 1, %s3
  %s6 = scalar_select 0, %s5, %s3
  $region1: #{tpu_custom_call.1} parent=0
    #allocation3 [shape = 'u8[8192]{0}', space=vmem, size = 0x2000, scoped, tag = 'input window, operand 0, single buffered']
    #allocation4 [shape = 's32[1]{0}', space=sflag, size = 0x4, scoped, tag = 'scoped memory for tpu_custom_call.1']
    #allocation5 [shape = 's32[1]{0}', space=sflag, size = 0x4, scoped, tag = 'scoped memory for tpu_custom_call.1']
    #allocation6 [shape = 'u8[8192]{0}', space=vmem, size = 0x2000, scoped, tag = 'input window, operand 1, single buffered']
    #allocation7 [shape = 's32[1]{0}', space=sflag, size = 0x4, scoped, tag = 'scoped memory for tpu_custom_call.1']
    #allocation8 [shape = 'u8[8192]{0}', space=vmem, size = 0x2000, scoped, tag = 'output window, operand 0, single buffered']
    %7 = vsyncpa [#allocation4], 0
    %8 = vsyncpa [#allocation7], 0
    %9 = vsyncpa [#allocation5], 0
    // Predicated region
    $region2: #{tpu_custom_call.1} parent=1 // pred_check
      _
    $region3: #{tpu_custom_call.1} parent=1 // pred_check_branch
      %11 = sbr.rel (0) target = $region5
    $region4: #{tpu_custom_call.1} parent=1 // pred_region
      %s12 = sadd.s32 0, 0
      %p13 = scmp.lt.s32.totalorder %s12, 0
      %s14 = scalar_select %p13, %s12, 0
      %16 = vsyncadd [#allocation4], 0
      %s17 = smul.addr %s14, 8
      %s18 = scalar_lea.hbm %s0, %s17
      %s19 = sshll.u32 %s18, 4
      %s20 = int_to_ptr.hbm [resolvable:$true] %s19
      %s21 = sshll.u32 [#allocation3], 4
      %s22 = int_to_ptr.vmem [resolvable:$true] %s21
      %27 = dma.hbm_to_vmem [thread:$0]  %s20, 256, %s22, [#allocation4], 128, 128, 8
    $region5: #{tpu_custom_call.1} parent=1 // pred_fallthru
      _
    // Predicated region
    $region6: #{tpu_custom_call.1} parent=1 // pred_check
      _
    $region7: #{tpu_custom_call.1} parent=1 // pred_check_branch
      %29 = sbr.rel (0) target = $region9
    $region8: #{tpu_custom_call.1} parent=1 // pred_region
      %s30 = sadd.s32 0, 0
      %p31 = scmp.lt.s32.totalorder %s30, 0
      %s32 = scalar_select %p31, %s30, 0
      %34 = vsyncadd [#allocation7], 0
      %s35 = smul.addr %s32, 8
      %s36 = scalar_lea.hbm %s1, %s35
      %s37 = sshll.u32 %s36, 4
      %s38 = int_to_ptr.hbm [resolvable:$true] %s37
      %s39 = sshll.u32 [#allocation6], 4
      %s40 = int_to_ptr.vmem [resolvable:$true] %s39
      %45 = dma.hbm_to_vmem [thread:$0]  %s38, 256, %s40, [#allocation7], 128, 128, 8
    $region9: #{tpu_custom_call.1} parent=1 // pred_fallthru
      _
    // Predicated region
    $region10: #{tpu_custom_call.1} parent=1 // pred_check
      _
    $region11: #{tpu_custom_call.1} parent=1 // pred_check_branch
      %47 = sbr.rel (0) target = $region13
    $region12: #{tpu_custom_call.1} parent=1 // pred_region
      %49 = dma.done [#allocation4], 256
    $region13: #{tpu_custom_call.1} parent=1 // pred_fallthru
      _
    // Predicated region
    $region14: #{tpu_custom_call.1} parent=1 // pred_check
      _
    $region15: #{tpu_custom_call.1} parent=1 // pred_check_branch
      %51 = sbr.rel (0) target = $region17
    $region16: #{tpu_custom_call.1} parent=1 // pred_region
      %53 = dma.done [#allocation7], 256
    $region17: #{tpu_custom_call.1} parent=1 // pred_fallthru
      _
    %s54 = sadd.s32 0, 0
    %p55 = scmp.lt.s32.totalorder %s54, 0
    %s56 = scalar_select %p55, %s54, 0
    %s57 = sadd.s32 0, 0
    %p58 = scmp.lt.s32.totalorder %s57, 0
    %s59 = scalar_select %p58, %s57, 0
    %v60 = vld [vmem:[#allocation3] sm:$0xff]
    %v61 = vld [vmem:[#allocation3 + $0x8] sm:$0xff]
    %v62 = vld [vmem:[#allocation6] sm:$0xff]
    %v63 = vld [vmem:[#allocation6 + $0x8] sm:$0xff]
    %v64 = vmax.f32 %v60, %v61
    %v65 = vrot.slane %v64, 4
    %v66 = vmax.f32 %v64, %v65
    %v67 = vrot.slane %v66, 2
    %v68 = vmax.f32 %v66, %v67
    %v69 = vrot.slane %v68, 1
    %v70 = vmax.f32 %v68, %v69
    %v71 = vadd.f32 %v70, 1e-06
    %v72 = vrcp.pop %v71
    %v73 = vmul.f32 %v71, %v72
    %v74 = vsub.f32 1.0, %v73
    %v75 = vmul.f32 %v72, %v74
    %v76 = vadd.f32 %v72, %v75
    %vm77 = vweird.f32 %v71
    %vm78 = vweird.f32 %v72
    %vm79 = vmor %vm77, %vm78
    %v80 = vsel %vm79, %v72, %v76
    %v81 = vand.u32 2147483647, %v71
    %vm82 = vcmp.eq.f32.partialorder %v81, 8.507059e+37
    %v83 = vand.u32 %v71, 2147483648
    %v84 = vor.u32 1.1754944e-38, %v83
    %v85 = vsel %vm82, %v84, %v80
    %v86 = vmul.f32 %v60, %v62
    %v87 = vmul.f32 %v61, %v63
    %v88 = vmul.f32 %v86, %v85
    %v89 = vmul.f32 %v87, %v85
    %p90 = scmp.eq.s32.totalorder 0, 0
    // Predicated region
    $region18: #{tpu_custom_call.1} parent=1 // pred_check
      %p91 = pneg %p90
    $region19: #{tpu_custom_call.1} parent=1 // pred_check_branch
      %93 = sbr.rel (%p91) target = $region21
    $region20: #{tpu_custom_call.1} parent=1 // pred_region
      %94 = vst [vmem:[#allocation2] sm:$0xff] %v88
      %95 = vst [vmem:[#allocation2 + $0x8] sm:$0xff] %v89
    $region21: #{tpu_custom_call.1} parent=1 // pred_fallthru
      _
    %p96 = scmp.gt.s32.totalorder 0, 0
    // Predicated region
    $region22: #{tpu_custom_call.1} parent=1 // pred_check
      %p97 = pneg %p96
    $region23: #{tpu_custom_call.1} parent=1 // pred_check_branch
      %99 = sbr.rel (%p97) target = $region25
    $region24: #{tpu_custom_call.1} parent=1 // pred_region
      %v100 = vld [vmem:[#allocation2] sm:$0xff]
      %v101 = vld [vmem:[#allocation2 + $0x8] sm:$0xff]
      %v102 = vmax.f32 %v100, %v88
      %v103 = vmax.f32 %v101, %v89
      %104 = vst [vmem:[#allocation2] sm:$0xff] %v102
      %105 = vst [vmem:[#allocation2 + $0x8] sm:$0xff] %v103
    $region25: #{tpu_custom_call.1} parent=1 // pred_fallthru
      _
    // Predicated region
    $region26: #{tpu_custom_call.1} parent=1 // pred_check
      %p106 = pneg %p90
    $region27: #{tpu_custom_call.1} parent=1 // pred_check_branch
      %108 = sbr.rel (%p106) target = $region29
    $region28: #{tpu_custom_call.1} parent=1 // pred_region
      %v109 = vld [vmem:[#allocation2] sm:$0xff]
      %v110 = vld [vmem:[#allocation2 + $0x8] sm:$0xff]
      %111 = vst [vmem:[#allocation8] sm:$0xff] %v109
      %112 = vst [vmem:[#allocation8 + $0x8] sm:$0xff] %v110
    $region29: #{tpu_custom_call.1} parent=1 // pred_fallthru
      _
    // Predicated region
    $region30: #{tpu_custom_call.1} parent=1 // pred_check
      _
    $region31: #{tpu_custom_call.1} parent=1 // pred_check_branch
      %114 = sbr.rel (0) target = $region33
    $region32: #{tpu_custom_call.1} parent=1 // pred_region
      %116 = vsyncadd [#allocation5], 0
      %s117 = sshll.u32 [#allocation8], 4
      %s118 = int_to_ptr.vmem [resolvable:$true] %s117
      %s119 = sshll.u32 %s2, 4
      %s120 = int_to_ptr.hbm [resolvable:$true] %s119
      %125 = dma.vmem_to_hbm [thread:$0]  %s118, 256, %s120, [#allocation5], 128, 128, 8
    $region33: #{tpu_custom_call.1} parent=1 // pred_fallthru
      _
    // Predicated region
    $region34: #{tpu_custom_call.1} parent=1 // pred_check
      _
    $region35: #{tpu_custom_call.1} parent=1 // pred_check_branch
      %127 = sbr.rel (0) target = $region37
    $region36: #{tpu_custom_call.1} parent=1 // pred_region
      %129 = dma.done [#allocation5], 256
    $region37: #{tpu_custom_call.1} parent=1 // pred_fallthru
      _
    %130 = vsyncpa [#allocation4], 1
    %131 = vsyncpa [#allocation7], 1
    %132 = vsyncpa [#allocation5], 1

</llo_original>
